<compile_context>
chip_gen: v6e
topology: v6e:2x2x1
jax: 0.10.0
libtpu: 0.0.40
codegen_flags: <defaults>
</compile_context>

<pallas_src>
import functools

import jax
import jax.numpy as jnp
from jax.experimental import pallas as pl
from jax.experimental.pallas import tpu as pltpu


# ---------------------------------------------------------------------------
# Shared elementwise math (f32).
# ---------------------------------------------------------------------------
def _gce_math(x, t, q, mode, *, in_kernel):
    l1 = jnp.abs(x - t)  # == nn.L1Loss(reduction='none'); detach() value-neutral
    if mode == "tanh":
        # tanh((1/l1)**q) == tanh(exp(-q*log(l1))); differs by a few ulps for
        # tiny l1.  l1 == 0: log=-inf -> exp=+inf -> tanh=1 -> 1*0 = 0.
        w = jnp.tanh(jnp.exp(-q * jnp.log(l1)))
    elif mode == "sigmoid":
        if in_kernel:
            # 2*sigmoid(-l1) == 2/(1+exp(l1)); l1 >= 0 so exp never underflows
            # the stable branch jax.nn.sigmoid would pick.  EUP exp + approx
            # vrcp (free EUP slot).  l1 > ~88 -> weight exactly 0 (vs ~1e-38).
            w = 2.0 * pl.reciprocal(1.0 + jnp.exp(l1), approx=True)
        else:
            w = 2.0 * jax.nn.sigmoid(-l1)
    else:
        raise ValueError(f"unsupported gce mode: {mode}")
    return w * l1


def _gce_loss_kernel(logits_ref, targets_ref, out_ref, *, q, mode):
    # f32 compute: correct on all generations (v5e has no bf16 VPU/EUP).
    x = logits_ref[...].astype(jnp.float32)
    t = targets_ref[...].astype(jnp.float32)
    out_ref[...] = _gce_math(x, t, q, mode, in_kernel=True).astype(out_ref.dtype)


# ---------------------------------------------------------------------------
# Tiling helpers.
# ---------------------------------------------------------------------------
_TARGET_BLOCK_ROWS = 2048  # 2048 x 512 f32 = 4 MiB/block/array; x3 arrays x2 bufs = 24 MiB


def _pick_lanes(n):
    """Lane-dense last dim (multiple of 128) that divides n, or None if ragged."""
    for bc in (512, 256, 128):
        if n % bc == 0:
            return bc
    return None


def _pick_block_rows(rows, sub, target=_TARGET_BLOCK_ROWS):
    """Sublane-aligned row tile, capped at `target` rows, with >= 2 (ideally
    >= 4) grid steps so v7x's two TensorCores both get work."""
    if rows <= 2 * sub:
        return rows                                   # single full-array block
    br = max(sub, min(target, (rows // 2) // sub * sub))
    if rows >= 4 * sub and pl.cdiv(rows, br) < 4:
        br = max(sub, (rows // 4) // sub * sub)       # force >= 4 blocks
    return br


def _run_gce_kernel(l2d, t2d, out_dtype, q, mode):
    rows, bc = l2d.shape
    sub = max(8, 32 // jnp.dtype(l2d.dtype).itemsize)  # 8 f32 / 16 bf16 / 32 int8
    br = _pick_block_rows(rows, sub)
    grid = (pl.cdiv(rows, br),)                        # partial last block OK
    kernel = functools.partial(_gce_loss_kernel, q=float(q), mode=mode)
    return pl.pallas_call(
        kernel,
        out_shape=jax.ShapeDtypeStruct((rows, bc), out_dtype),
        grid=grid,
        in_specs=[pl.BlockSpec((br, bc), lambda i: (i, 0)),
                  pl.BlockSpec((br, bc), lambda i: (i, 0))],
        out_specs=pl.BlockSpec((br, bc), lambda i: (i, 0)),
        compiler_params=pltpu.CompilerParams(
            dimension_semantics=("parallel",),  # shard row blocks over v7x's 2 TCs
            vmem_limit_bytes=48 << 20),
    )(l2d, t2d)


# ---------------------------------------------------------------------------
# Public entry point.
# ---------------------------------------------------------------------------
def generalized_ce_loss(logits, targets, *, gce="tanh", q=0.7):
    """GeneralizedCELoss forward. Accepts arbitrary-rank, same-shaped inputs."""
    if gce not in ("tanh", "sigmoid"):
        # PyTorch `else: loss = 0` branch — scalar constant, no kernel launch.
        return jnp.zeros((), dtype=logits.dtype)

    assert logits.shape == targets.shape, "logits/targets must have the same shape"
    orig_shape = logits.shape
    in_dtype = logits.dtype
    # Guard against integer inputs producing truncated garbage losses.
    out_dtype = in_dtype if jnp.issubdtype(in_dtype, jnp.floating) else jnp.float32
    n = logits.size
    if n == 0:
        return jnp.zeros(orig_shape, dtype=out_dtype)

    lf = logits.reshape(-1)
    tf = targets.reshape(-1)

    bc = _pick_lanes(n)
    if bc is not None:
        # Aligned fast path: pure reshape (no pad copy), kernel writes the
        # final buffer directly (no slice copy) -> exactly 3 HBM passes.
        rows = n // bc
        out2d = _run_gce_kernel(lf.reshape(rows, bc), tf.reshape(rows, bc),
                                out_dtype, q, gce)
        return out2d.reshape(orig_shape)

    # Ragged size: kernel on the 512-lane-aligned prefix, tiny (< 512 element)
    # plain-jnp tail epilogue, single concatenate. Avoids padding both inputs.
    bc = 512
    main_n = (n // bc) * bc
    parts = []
    if main_n:
        main = _run_gce_kernel(lf[:main_n].reshape(main_n // bc, bc),
                               tf[:main_n].reshape(main_n // bc, bc),
                               out_dtype, q, gce)
        parts.append(main.reshape(-1))
    tail = _gce_math(lf[main_n:].astype(jnp.float32),
                     tf[main_n:].astype(jnp.float32),
                     float(q), gce, in_kernel=False).astype(out_dtype)
    parts.append(tail)
    out = jnp.concatenate(parts) if len(parts) > 1 else parts[0]
    return out.reshape(orig_shape)


# ---------------------------------------------------------------------------
# Pure-JAX reference (mirrors the PyTorch module exactly).
# ---------------------------------------------------------------------------
def _reference(logits, targets, gce, q):
    x = logits.astype(jnp.float32)
    t = targets.astype(jnp.float32)
    l1 = jnp.abs(x - t)
    if gce == "tanh":
        out = jnp.tanh((1.0 / l1) ** q) * l1
    elif gce == "sigmoid":
        out = 2.0 * jax.nn.sigmoid(-l1) * l1
    else:
        return jnp.zeros((), dtype=logits.dtype)
    return out.astype(logits.dtype)


if __name__ == "__main__":
    key = jax.random.PRNGKey(0)
    k1, k2 = jax.random.split(key)

    ok = True

    # --- main NCHW-like tensor: 2048 elements, aligned fast path ------------
    shape = (2, 4, 16, 16)
    logits = jax.random.normal(k1, shape, dtype=jnp.float32)
    targets = jax.random.normal(k2, shape, dtype=jnp.float32)
    # Exercise the l1 == 0 edge case explicitly (must be exactly 0, not NaN).
    targets = targets.at[0, 0, 0, :].set(logits[0, 0, 0, :])

    # sigmoid uses the approximate EUP reciprocal -> looser relative tolerance.
    for mode, rtol in (("tanh", 1e-5), ("sigmoid", 5e-3)):
        out = jax.block_until_ready(
            generalized_ce_loss(logits, targets, gce=mode, q=0.7))
        ref = _reference(logits, targets, mode, 0.7)
        ok &= bool(jnp.allclose(out, ref, atol=1e-5, rtol=rtol))
        ok &= bool(jnp.all(jnp.isfinite(out)))
        ok &= bool(jnp.all(out[0, 0, 0, :] == 0.0))

    # --- larger aligned tensor: multi-block grid (>= 4 row blocks) ----------
    big_shape = (8, 4, 64, 32)  # 65536 elements -> (128, 512) slab, 4 blocks
    bl32 = jax.random.normal(k1, big_shape, dtype=jnp.float32)
    bt32 = jax.random.normal(k2, big_shape, dtype=jnp.float32)
    out_big = jax.block_until_ready(
        generalized_ce_loss(bl32, bt32, gce="tanh", q=0.7))
    ok &= bool(jnp.allclose(out_big, _reference(bl32, bt32, "tanh", 0.7),
                            atol=1e-5, rtol=1e-5))

    # --- ragged size exercising kernel-prefix + jnp-tail path ---------------
    rag_l = jax.random.normal(k1, (7, 300), dtype=jnp.float32)   # 2100 elements
    rag_t = jax.random.normal(k2, (7, 300), dtype=jnp.float32)
    out_rag = jax.block_until_ready(
        generalized_ce_loss(rag_l, rag_t, gce="tanh", q=0.7))
    ok &= bool(jnp.allclose(out_rag, _reference(rag_l, rag_t, "tanh", 0.7),
                            atol=1e-5, rtol=1e-5))
    ok &= out_rag.shape == (7, 300)

    # --- tiny ragged size (pure jnp epilogue, no kernel needed) -------------
    odd_l = jax.random.normal(k1, (3, 5, 7), dtype=jnp.float32)  # 105 elements
    odd_t = jax.random.normal(k2, (3, 5, 7), dtype=jnp.float32)
    out_odd = jax.block_until_ready(
        generalized_ce_loss(odd_l, odd_t, gce="tanh", q=0.7))
    ok &= bool(jnp.allclose(out_odd, _reference(odd_l, odd_t, "tanh", 0.7),
                            atol=1e-5, rtol=1e-5))
    ok &= out_odd.shape == (3, 5, 7)

    # --- bf16 path (f32 compute in-kernel, bf16 output rounding) ------------
    bl = jax.random.normal(k1, shape, dtype=jnp.bfloat16)
    bt = jax.random.normal(k2, shape, dtype=jnp.bfloat16)
    out_bf = jax.block_until_ready(
        generalized_ce_loss(bl, bt, gce="sigmoid", q=0.7))
    ok &= bool(jnp.allclose(out_bf.astype(jnp.float32),
                            _reference(bl, bt, "sigmoid", 0.7).astype(jnp.float32),
                            atol=2e-2, rtol=2e-2))

    # --- 'else' branch: scalar 0, no kernel launch ---------------------------
    zero = jax.block_until_ready(generalized_ce_loss(logits, targets, gce="none"))
    ok &= (zero.shape == () and float(zero) == 0.0)

    if ok:
        print("KERNEL_OK")
</pallas_src>

<mosaic_0001>
module attributes {stable_mosaic.version = 11 : i64} {
  func.func @_gce_loss_kernel(%arg0: i32, %arg1: memref<4x512xf32, #tpu.memory_space<vmem>>, %arg2: memref<4x512xf32, #tpu.memory_space<vmem>>, %arg3: memref<4x512xf32, #tpu.memory_space<vmem>>) attributes {dimension_semantics = [#tpu.dimension_semantics<parallel>], iteration_bounds = array<i64: 1>, scalar_prefetch = 0 : i64, scratch_operands = 0 : i64, tpu.core_type = #tpu.core_type<tc>, window_params = [{transform_indices = @transform_0, window_bounds = array<i64: 4, 512>}, {transform_indices = @transform_1, window_bounds = array<i64: 4, 512>}, {transform_indices = @transform_2, window_bounds = array<i64: 4, 512>}]} {
    %c0 = arith.constant 0 : index
    %c0_0 = arith.constant 0 : index
    %0 = vector.load %arg1[%c0, %c0_0] : memref<4x512xf32, #tpu.memory_space<vmem>>, vector<4x512xf32>
    %c0_1 = arith.constant 0 : index
    %c0_2 = arith.constant 0 : index
    %1 = vector.load %arg2[%c0_1, %c0_2] : memref<4x512xf32, #tpu.memory_space<vmem>>, vector<4x512xf32>
    %2 = arith.subf %0, %1 : vector<4x512xf32>
    %3 = math.absf %2 : vector<4x512xf32>
    %4 = math.log %3 : vector<4x512xf32>
    %cst = arith.constant -0.699999988 : f32
    %5 = vector.broadcast %cst : f32 to vector<4x512xf32>
    %6 = arith.mulf %5, %4 : vector<4x512xf32>
    %7 = math.exp %6 : vector<4x512xf32>
    %8 = math.tanh %7 : vector<4x512xf32>
    %9 = arith.mulf %8, %3 : vector<4x512xf32>
    %c0_3 = arith.constant 0 : index
    %c0_4 = arith.constant 0 : index
    %10 = vector.load %arg3[%c0_3, %c0_4] : memref<4x512xf32, #tpu.memory_space<vmem>>, vector<4x512xf32>
    tpu.vector_store %arg3[%c0_3, %c0_4], %9 {strides = array<i32>} : memref<4x512xf32, #tpu.memory_space<vmem>>, vector<4x512xf32>,
    return
  }
  func.func @transform_0(%arg0: i32) -> (i32, i32) {
    %c0_i32 = arith.constant 0 : i32
    %c0_i32_0 = arith.constant 0 : i32
    return %arg0, %c0_i32 : i32, i32
  }
  func.func @transform_1(%arg0: i32) -> (i32, i32) {
    %c0_i32 = arith.constant 0 : i32
    %c0_i32_0 = arith.constant 0 : i32
    return %arg0, %c0_i32 : i32, i32
  }
  func.func @transform_2(%arg0: i32) -> (i32, i32) {
    %c0_i32 = arith.constant 0 : i32
    %c0_i32_0 = arith.constant 0 : i32
    return %arg0, %c0_i32 : i32, i32
  }
}

</mosaic_0001>

<llo_original>
// kernel: tpu_custom_call.1
$region0: #{tpu_custom_call.1}
  #allocation0 [shape = 'u32[]', space=smem, size = 0x4, offset = 0x4, fixed_abs, tag = 'smem constant byte address 0x4 - core index']
  #allocation1 [shape = 'u32[144,128]{1,0:T(1,128)}', space=vmem, size = 0x12000, scoped, tag = 'internal scratch']
  %s0 = inlined_call_operand.hbm [shape: f32[4,512], index: 0, kind: input, shape index: {}]
  %s1 = inlined_call_operand.hbm [shape: f32[4,512], index: 1, kind: input, shape index: {}]
  %s2 = inlined_call_operand.hbm [shape: f32[4,512], index: 2, kind: output, shape index: {}]
  %s3 = sld [smem:[#allocation0]]
  $region26: #{tpu_custom_call.1} parent=0
    _
  %s5 = ssub.s32 1, %s3
  %s6 = scalar_select 0, %s5, %s3
  $region1: #{tpu_custom_call.1} parent=0
    #allocation2 [shape = 'u8[8192]{0}', space=vmem, size = 0x2000, scoped, tag = 'input window, operand 0, single buffered']
    #allocation3 [shape = 's32[1]{0}', space=sflag, size = 0x4, scoped, tag = 'scoped memory for tpu_custom_call.1']
    #allocation4 [shape = 's32[1]{0}', space=sflag, size = 0x4, scoped, tag = 'scoped memory for tpu_custom_call.1']
    #allocation5 [shape = 'u8[8192]{0}', space=vmem, size = 0x2000, scoped, tag = 'input window, operand 1, single buffered']
    #allocation6 [shape = 's32[1]{0}', space=sflag, size = 0x4, scoped, tag = 'scoped memory for tpu_custom_call.1']
    #allocation7 [shape = 'u8[8192]{0}', space=vmem, size = 0x2000, scoped, tag = 'output window, operand 0, single buffered']
    %7 = vsyncpa [#allocation3], 0
    %8 = vsyncpa [#allocation6], 0
    %9 = vsyncpa [#allocation4], 0
    // Predicated region
    $region2: #{tpu_custom_call.1} parent=1 // pred_check
      _
    $region3: #{tpu_custom_call.1} parent=1 // pred_check_branch
      %11 = sbr.rel (0) target = $region5
    $region4: #{tpu_custom_call.1} parent=1 // pred_region
      %s13 = ssub.s32 256, 256
      %14 = vsyncadd [#allocation3], %s13
      %s16 = sshll.u32 [#allocation2], 4
      %s17 = int_to_ptr.vmem [resolvable:$true] %s16
      %19 = dma.hbm_to_vmem [thread:$0]  %s0, 256, %s17, [#allocation3]
    $region5: #{tpu_custom_call.1} parent=1 // pred_fallthru
      _
    // Predicated region
    $region6: #{tpu_custom_call.1} parent=1 // pred_check
      _
    $region7: #{tpu_custom_call.1} parent=1 // pred_check_branch
      %21 = sbr.rel (0) target = $region9
    $region8: #{tpu_custom_call.1} parent=1 // pred_region
      %s23 = ssub.s32 256, 256
      %24 = vsyncadd [#allocation6], %s23
      %s26 = sshll.u32 [#allocation5], 4
      %s27 = int_to_ptr.vmem [resolvable:$true] %s26
      %29 = dma.hbm_to_vmem [thread:$0]  %s1, 256, %s27, [#allocation6]
    $region9: #{tpu_custom_call.1} parent=1 // pred_fallthru
      _
    // Predicated region
    $region10: #{tpu_custom_call.1} parent=1 // pred_check
      _
    $region11: #{tpu_custom_call.1} parent=1 // pred_check_branch
      %31 = sbr.rel (0) target = $region13
    $region12: #{tpu_custom_call.1} parent=1 // pred_region
      %32 = dma.done [#allocation3], 256
    $region13: #{tpu_custom_call.1} parent=1 // pred_fallthru
      _
    // Predicated region
    $region14: #{tpu_custom_call.1} parent=1 // pred_check
      _
    $region15: #{tpu_custom_call.1} parent=1 // pred_check_branch
      %34 = sbr.rel (0) target = $region17
    $region16: #{tpu_custom_call.1} parent=1 // pred_region
      %35 = dma.done [#allocation6], 256
    $region17: #{tpu_custom_call.1} parent=1 // pred_fallthru
      _
    %v36 = vld [vmem:[#allocation2] sm:$0xff]
    %v37 = vld [vmem:[#allocation2 + $0x8] sm:$0xff]
    %v38 = vld [vmem:[#allocation5] sm:$0xff]
    %v39 = vld [vmem:[#allocation5 + $0x8] sm:$0xff]
    %v40 = vsub.f32 %v36, %v38
    %v41 = vsub.f32 %v37, %v39
    %v42 = vand.u32 2147483647, %v40
    %v43 = vand.u32 2147483647, %v41
    %v44 = vlog2.pop %v42
    %v45 = vmul.f32 %v44, 0.6931472
    %v46 = vlog2.pop %v43
    %v47 = vmul.f32 %v46, 0.6931472
    %v48 = vmul.f32 %v45, -0.7
    %v49 = vmul.f32 %v47, -0.7
    %v50 = vmul.f32 %v48, 1.442695
    %v51 = vpow.pop %v50
    %v52 = vmul.f32 %v49, 1.442695
    %v53 = vpow.pop %v52
    %v54 = vtanh.pop %v51
    %v55 = vtanh.pop %v53
    %v56 = vmul.f32 %v54, %v42
    %v57 = vmul.f32 %v55, %v43
    %58 = vst [vmem:[#allocation7] sm:$0xff] %v56
    %59 = vst [vmem:[#allocation7 + $0x8] sm:$0xff] %v57
    // Predicated region
    $region18: #{tpu_custom_call.1} parent=1 // pred_check
      _
    $region19: #{tpu_custom_call.1} parent=1 // pred_check_branch
      %61 = sbr.rel (0) target = $region21
    $region20: #{tpu_custom_call.1} parent=1 // pred_region
      %s63 = ssub.s32 256, 256
      %64 = vsyncadd [#allocation4], %s63
      %s66 = sshll.u32 [#allocation7], 4
      %s67 = int_to_ptr.vmem [resolvable:$true] %s66
      %69 = dma.vmem_to_hbm [thread:$0]  %s67, 256, %s2, [#allocation4]
    $region21: #{tpu_custom_call.1} parent=1 // pred_fallthru
      _
    // Predicated region
    $region22: #{tpu_custom_call.1} parent=1 // pred_check
      _
    $region23: #{tpu_custom_call.1} parent=1 // pred_check_branch
      %71 = sbr.rel (0) target = $region25
    $region24: #{tpu_custom_call.1} parent=1 // pred_region
      %72 = dma.done [#allocation4], 256
    $region25: #{tpu_custom_call.1} parent=1 // pred_fallthru
      _
    %73 = vsyncpa [#allocation3], 1
    %74 = vsyncpa [#allocation6], 1
    %75 = vsyncpa [#allocation4], 1

</llo_original>
